<compile_context>
chip_gen: v5e
topology: v5e:2x2
jax: 0.10.0
libtpu: 0.0.40
codegen_flags: <defaults>
</compile_context>

<pallas_src>
import jax
import jax.numpy as jnp
from jax.experimental import pallas as pl
from jax.experimental.pallas import tpu as pltpu


def _round_up(x, m):
    return (x + m - 1) // m * m


def _choose_batch_tile(batch, *, cap=4096, min_grid_steps=4, min_tile=1024):
    """Pick a sublane-aligned batch tile.

    Goals (from the perf review):
      * each grid step is big enough (>= min_tile rows) that the ~0.35 us
        per-step overhead is amortized,
      * large batches get >= min_grid_steps steps so both v7x TensorCores
        engage and DMA/compute pipelining has work to overlap,
      * the tile never exceeds `cap` rows so the lane-padded, double-buffered
        VMEM footprint stays well under the scoped limit on v7x.
    """
    b8 = _round_up(batch, 8)
    if b8 <= min_tile:
        return b8                      # tiny batch: single small tile
    tb = _round_up(-(-b8 // min_grid_steps), 8)   # cdiv, sublane-aligned
    tb = max(min_tile, min(tb, cap))
    return min(tb, b8)


def q_kernel(s_ref, a_ref, w1s_ref, w1a_ref, b1_ref, w2_ref, b2_ref, o_ref):
    # lin1 as split-K:  concat(s, a) @ W1  ==  s @ W1[:ni] + a @ W1[ni:]
    h = jnp.dot(s_ref[...], w1s_ref[...], preferred_element_type=jnp.float32)
    h = h + jnp.dot(a_ref[...], w1a_ref[...], preferred_element_type=jnp.float32)
    # bias + tanh (VPU add + EUP tanh); padded hidden lanes are inert because
    # the matching w2 lanes are exactly zero.
    h = jnp.tanh(h + b1_ref[...])
    # lin2 as VPU multiply + XLU lane reduce instead of a [H,1] MXU matmul.
    o = jnp.sum(h * w2_ref[...], axis=-1, keepdims=True) + b2_ref[0]
    o_ref[...] = o.astype(o_ref.dtype)


def q_forward(s, a, w1_s, w1_a, b1, w2_row, b2, *, batch_tile_cap=4096):
    """s: [B, num_inputs], a: [B, num_actions]. Returns [B, 1] (float32)."""
    B, ni = s.shape
    _, na = a.shape
    H_pad = w1_s.shape[1]

    TB = _choose_batch_tile(B, cap=batch_tile_cap)
    grid = (pl.cdiv(B, TB),)           # ragged last block handled by Pallas

    out = pl.pallas_call(
        q_kernel,
        out_shape=jax.ShapeDtypeStruct((B, 1), jnp.float32),
        grid=grid,
        in_specs=[
            pl.BlockSpec((TB, ni), lambda i: (i, 0)),        # s tile
            pl.BlockSpec((TB, na), lambda i: (i, 0)),        # a tile
            pl.BlockSpec((ni, H_pad), lambda i: (0, 0)),     # W1[:ni]  (resident)
            pl.BlockSpec((na, H_pad), lambda i: (0, 0)),     # W1[ni:]  (resident)
            pl.BlockSpec((1, H_pad), lambda i: (0, 0)),      # b1       (resident)
            pl.BlockSpec((1, H_pad), lambda i: (0, 0)),      # w2 row   (resident)
            pl.BlockSpec(memory_space=pltpu.MemorySpace.SMEM),  # b2 scalar
        ],
        out_specs=pl.BlockSpec((TB, 1), lambda i: (i, 0)),
        compiler_params=pltpu.CompilerParams(
            dimension_semantics=("parallel",),               # megacore on v7x
            vmem_limit_bytes=32 * 1024 * 1024,               # safe on v5e/v6e/v7x
        ),
    )(s, a, w1_s, w1_a, b1, w2_row, b2)
    return out


def init_params(key, num_inputs, num_actions):
    """Deterministic init mirroring nn.Linear default (uniform +/- 1/sqrt(fan_in))."""
    in_dim = num_inputs + num_actions
    hidden = in_dim * 2
    k1, k2, k3, k4 = jax.random.split(key, 4)

    bound1 = 1.0 / jnp.sqrt(in_dim)
    w1 = jax.random.uniform(k1, (in_dim, hidden), jnp.float32, -bound1, bound1)
    b1 = jax.random.uniform(k2, (hidden,), jnp.float32, -bound1, bound1)

    bound2 = 1.0 / jnp.sqrt(hidden)
    w2 = jax.random.uniform(k3, (hidden, 1), jnp.float32, -bound2, bound2)
    b2 = jax.random.uniform(k4, (1,), jnp.float32, -bound2, bound2)
    return w1, b1, w2, b2


def prepare_params(w1, b1, w2, b2, num_inputs):
    """One-time prep: split W1 along K (s|a), zero-pad hidden to 128 lanes,
    lay w2 out as a [1, H_pad] row for the in-kernel VPU reduce, and flatten
    b2 to a [1] scalar for SMEM."""
    in_dim, hidden = w1.shape
    H_pad = _round_up(hidden, 128)
    pad_h = H_pad - hidden

    w1p = jnp.pad(w1, ((0, 0), (0, pad_h)))
    w1_s = w1p[:num_inputs]                               # [num_inputs, H_pad]
    w1_a = w1p[num_inputs:]                               # [num_actions, H_pad]
    b1p = jnp.pad(b1.reshape(1, hidden), ((0, 0), (0, pad_h)))       # [1, H_pad]
    w2_row = jnp.pad(w2.reshape(hidden, 1), ((0, pad_h), (0, 0))).T  # [1, H_pad]
    b2p = b2.reshape(1)                                   # [1]  (SMEM scalar)
    return w1_s, w1_a, b1p, w2_row, b2p


if __name__ == "__main__":
    num_inputs, num_actions, batch = 24, 8, 8   # in_dim=32, hidden=64 (padded to 128)

    key = jax.random.PRNGKey(0)
    ks, ka, kp, ks2, ka2 = jax.random.split(key, 5)
    s = jax.random.normal(ks, (batch, num_inputs), jnp.float32)
    a = jax.random.normal(ka, (batch, num_actions), jnp.float32)

    w1, b1, w2, b2 = init_params(kp, num_inputs, num_actions)
    params = prepare_params(w1, b1, w2, b2, num_inputs)

    # --- small-batch check (single grid step) ---
    out = jax.block_until_ready(q_forward(s, a, *params))
    x = jnp.concatenate([s, a], axis=-1)
    ref = jnp.tanh(x @ w1 + b1[None, :]) @ w2 + b2[None, :]
    assert out.shape == (batch, 1)
    assert jnp.allclose(out, ref, atol=1e-4, rtol=1e-4)

    # --- ragged multi-step grid check (no wrapper-side jnp.pad) ---
    batch2 = 3000                                  # 3 tiles of 1024, last ragged
    s2 = jax.random.normal(ks2, (batch2, num_inputs), jnp.float32)
    a2 = jax.random.normal(ka2, (batch2, num_actions), jnp.float32)
    out2 = jax.block_until_ready(q_forward(s2, a2, *params))
    x2 = jnp.concatenate([s2, a2], axis=-1)
    ref2 = jnp.tanh(x2 @ w1 + b1[None, :]) @ w2 + b2[None, :]
    assert out2.shape == (batch2, 1)
    assert jnp.allclose(out2, ref2, atol=1e-4, rtol=1e-4)

    print("KERNEL_OK")
</pallas_src>

<mosaic_0001>
module attributes {stable_mosaic.version = 11 : i64} {
  func.func @q_kernel(%arg0: i32, %arg1: memref<8x24xf32, #tpu.memory_space<vmem>>, %arg2: memref<8x8xf32, #tpu.memory_space<vmem>>, %arg3: memref<24x128xf32, #tpu.memory_space<vmem>>, %arg4: memref<8x128xf32, #tpu.memory_space<vmem>>, %arg5: memref<1x128xf32, #tpu.memory_space<vmem>>, %arg6: memref<1x128xf32, #tpu.memory_space<vmem>>, %arg7: memref<1xf32, #tpu.memory_space<smem>>, %arg8: memref<8x1xf32, #tpu.memory_space<vmem>>) attributes {dimension_semantics = [#tpu.dimension_semantics<parallel>], iteration_bounds = array<i64: 1>, scalar_prefetch = 0 : i64, scratch_operands = 0 : i64, tpu.core_type = #tpu.core_type<tc>, window_params = [{transform_indices = @transform_0, window_bounds = array<i64: 8, 24>}, {transform_indices = @transform_1, window_bounds = array<i64: 8, 8>}, {pipeline_mode = #tpu.pipeline_mode<synchronous>, transform_indices = @transform_2, window_bounds = array<i64: 24, 128>}, {pipeline_mode = #tpu.pipeline_mode<synchronous>, transform_indices = @transform_3, window_bounds = array<i64: 8, 128>}, {pipeline_mode = #tpu.pipeline_mode<synchronous>, transform_indices = @transform_4, window_bounds = array<i64: 1, 128>}, {pipeline_mode = #tpu.pipeline_mode<synchronous>, transform_indices = @transform_5, window_bounds = array<i64: 1, 128>}, {transform_indices = @transform_6, window_bounds = array<i64: 1>}, {transform_indices = @transform_7, window_bounds = array<i64: 8, 1>}]} {
    %c0 = arith.constant 0 : index
    %c0_0 = arith.constant 0 : index
    %0 = vector.load %arg1[%c0, %c0_0] : memref<8x24xf32, #tpu.memory_space<vmem>>, vector<8x24xf32>
    %c0_1 = arith.constant 0 : index
    %c0_2 = arith.constant 0 : index
    %1 = vector.load %arg3[%c0_1, %c0_2] : memref<24x128xf32, #tpu.memory_space<vmem>>, vector<24x128xf32>
    %cst = arith.constant dense<0.000000e+00> : vector<8x128xf32>
    %2 = tpu.matmul %0, %1, %cst {dimension_numbers = #tpu.dot_dimension_numbers<[1], [0], [0], [1], [0, 0, 1, 1], [], []>} : vector<8x24xf32>, vector<24x128xf32>, vector<8x128xf32> -> vector<8x128xf32>
    %c0_3 = arith.constant 0 : index
    %c0_4 = arith.constant 0 : index
    %3 = vector.load %arg2[%c0_3, %c0_4] : memref<8x8xf32, #tpu.memory_space<vmem>>, vector<8x8xf32>
    %c0_5 = arith.constant 0 : index
    %c0_6 = arith.constant 0 : index
    %4 = vector.load %arg4[%c0_5, %c0_6] : memref<8x128xf32, #tpu.memory_space<vmem>>, vector<8x128xf32>
    %cst_7 = arith.constant dense<0.000000e+00> : vector<8x128xf32>
    %5 = tpu.matmul %3, %4, %cst_7 {dimension_numbers = #tpu.dot_dimension_numbers<[1], [0], [0], [1], [0, 0, 1, 1], [], []>} : vector<8x8xf32>, vector<8x128xf32>, vector<8x128xf32> -> vector<8x128xf32>
    %6 = arith.addf %2, %5 : vector<8x128xf32>
    %c0_8 = arith.constant 0 : index
    %c0_9 = arith.constant 0 : index
    %7 = vector.load %arg5[%c0_8, %c0_9] : memref<1x128xf32, #tpu.memory_space<vmem>>, vector<1x128xf32>
    %8 = vector.broadcast %7 : vector<1x128xf32> to vector<8x128xf32>
    %9 = arith.addf %6, %8 : vector<8x128xf32>
    %10 = math.tanh %9 : vector<8x128xf32>
    %c0_10 = arith.constant 0 : index
    %c0_11 = arith.constant 0 : index
    %11 = vector.load %arg6[%c0_10, %c0_11] : memref<1x128xf32, #tpu.memory_space<vmem>>, vector<1x128xf32>
    %12 = vector.broadcast %11 : vector<1x128xf32> to vector<8x128xf32>
    %13 = arith.mulf %10, %12 : vector<8x128xf32>
    %cst_12 = arith.constant dense<0.000000e+00> : vector<8xf32>
    %14 = vector.multi_reduction <add>, %13, %cst_12 [1] : vector<8x128xf32> to vector<8xf32>
    %15 = vector.shape_cast %14 : vector<8xf32> to vector<8x1xf32>
    %c0_13 = arith.constant 0 : index
    %16 = memref.load %arg7[%c0_13] : memref<1xf32, #tpu.memory_space<smem>>
    %17 = vector.broadcast %16 : f32 to vector<8x1xf32>
    %18 = arith.addf %15, %17 : vector<8x1xf32>
    %c0_14 = arith.constant 0 : index
    %c0_15 = arith.constant 0 : index
    %19 = vector.load %arg8[%c0_14, %c0_15] : memref<8x1xf32, #tpu.memory_space<vmem>>, vector<8x1xf32>
    tpu.vector_store %arg8[%c0_14, %c0_15], %18 {strides = array<i32>} : memref<8x1xf32, #tpu.memory_space<vmem>>, vector<8x1xf32>,
    return
  }
  func.func @transform_0(%arg0: i32) -> (i32, i32) {
    %c0_i32 = arith.constant 0 : i32
    %c0_i32_0 = arith.constant 0 : i32
    return %arg0, %c0_i32 : i32, i32
  }
  func.func @transform_1(%arg0: i32) -> (i32, i32) {
    %c0_i32 = arith.constant 0 : i32
    %c0_i32_0 = arith.constant 0 : i32
    return %arg0, %c0_i32 : i32, i32
  }
  func.func @transform_2(%arg0: i32) -> (i32, i32) {
    %c0_i32 = arith.constant 0 : i32
    %c0_i32_0 = arith.constant 0 : i32
    %c0_i32_1 = arith.constant 0 : i32
    return %c0_i32, %c0_i32_0 : i32, i32
  }
  func.func @transform_3(%arg0: i32) -> (i32, i32) {
    %c0_i32 = arith.constant 0 : i32
    %c0_i32_0 = arith.constant 0 : i32
    %c0_i32_1 = arith.constant 0 : i32
    return %c0_i32, %c0_i32_0 : i32, i32
  }
  func.func @transform_4(%arg0: i32) -> (i32, i32) {
    %c0_i32 = arith.constant 0 : i32
    %c0_i32_0 = arith.constant 0 : i32
    %c0_i32_1 = arith.constant 0 : i32
    return %c0_i32, %c0_i32_0 : i32, i32
  }
  func.func @transform_5(%arg0: i32) -> (i32, i32) {
    %c0_i32 = arith.constant 0 : i32
    %c0_i32_0 = arith.constant 0 : i32
    %c0_i32_1 = arith.constant 0 : i32
    return %c0_i32, %c0_i32_0 : i32, i32
  }
  func.func @transform_6(%arg0: i32) -> i32 {
    %c0_i32 = arith.constant 0 : i32
    %c0_i32_0 = arith.constant 0 : i32
    return %c0_i32 : i32
  }
  func.func @transform_7(%arg0: i32) -> (i32, i32) {
    %c0_i32 = arith.constant 0 : i32
    %c0_i32_0 = arith.constant 0 : i32
    return %arg0, %c0_i32 : i32, i32
  }
}

</mosaic_0001>

<llo_original>
// kernel: tpu_custom_call.1
$region0: #{tpu_custom_call.1}
  #allocation0 [shape = 'u32[]', space=smem, size = 0x4, offset = 0x4, fixed_abs, tag = 'smem constant byte address 0x4 - core index']
  #allocation1 [shape = 'u32[72,128]{1,0:T(1,128)}', space=vmem, size = 0x9000, scoped, tag = 'internal scratch']
  #allocation2 [shape = 'f32[1]{0:T(128)S(6)}', space=smem, size = 0x200, scoped, tag = 'scoped memory for tpu_custom_call.1']
  %s0 = inlined_call_operand.hbm [shape: f32[8,24], index: 0, kind: input, shape index: {}]
  %s1 = inlined_call_operand.hbm [shape: f32[8,8], index: 1, kind: input, shape index: {}]
  %s2 = inlined_call_operand.hbm [shape: f32[24,128], index: 2, kind: input, shape index: {}]
  %s3 = inlined_call_operand.hbm [shape: f32[8,128], index: 3, kind: input, shape index: {}]
  %s4 = inlined_call_operand.vmem [shape: f32[1,128], index: 4, kind: input, shape index: {}]
  %s5 = inlined_call_operand.vmem [shape: f32[1,128], index: 5, kind: input, shape index: {}]
  %s6 = inlined_call_operand.<no memory space> [shape: f32[1], index: 6, kind: input, shape index: {}]
  %s7 = inlined_call_operand.vmem [shape: f32[8,1], index: 7, kind: output, shape index: {}]
  %s8 = sld [smem:[#allocation0]]
  $region54: #{tpu_custom_call.1} parent=0
    _
  %s10 = ssub.s32 1, %s8
  %s11 = scalar_select 0, %s10, %s8
  %12 = sst [smem:[#allocation2]] %s6
  $region1: #{tpu_custom_call.1} parent=0
    #allocation3 [shape = 'u8[4096]{0}', space=vmem, size = 0x1000, scoped, tag = 'input window, operand 0, single buffered']
    #allocation4 [shape = 's32[1]{0}', space=sflag, size = 0x4, scoped, tag = 'scoped memory for tpu_custom_call.1']
    #allocation5 [shape = 'u8[4096]{0}', space=vmem, size = 0x1000, scoped, tag = 'input window, operand 1, single buffered']
    #allocation6 [shape = 's32[1]{0}', space=sflag, size = 0x4, scoped, tag = 'scoped memory for tpu_custom_call.1']
    #allocation7 [shape = 'u8[12288]{0}', space=vmem, size = 0x3000, scoped, tag = 'input window, operand 2, single buffered']
    #allocation8 [shape = 'u8[4096]{0}', space=vmem, size = 0x1000, scoped, tag = 'input window, operand 3, single buffered']
    #allocation9 [shape = 's32[1]{0}', space=sflag, size = 0x4, scoped, tag = 'scoped memory for tpu_custom_call.1']
    %13 = vsyncpa [#allocation4], 0
    %14 = vsyncpa [#allocation6], 0
    %15 = vsyncpa [#allocation9], 0
    // Predicated region
    $region2: #{tpu_custom_call.1} parent=1 // pred_check
      _
    $region3: #{tpu_custom_call.1} parent=1 // pred_check_branch
      %17 = sbr.rel (0) target = $region5
    $region4: #{tpu_custom_call.1} parent=1 // pred_region
      %19 = vsyncadd [#allocation4], 0
      %s21 = sshll.u32 %s0, 4
      %s22 = int_to_ptr.hbm [resolvable:$true] %s21
      %s23 = sshll.u32 [#allocation3], 4
      %s24 = int_to_ptr.vmem [resolvable:$true] %s23
      %26 = dma.hbm_to_vmem [thread:$0]  %s22, 128, %s24, [#allocation4]
    $region5: #{tpu_custom_call.1} parent=1 // pred_fallthru
      _
    // Predicated region
    $region6: #{tpu_custom_call.1} parent=1 // pred_check
      _
    $region7: #{tpu_custom_call.1} parent=1 // pred_check_branch
      %28 = sbr.rel (0) target = $region9
    $region8: #{tpu_custom_call.1} parent=1 // pred_region
      %30 = vsyncadd [#allocation6], 0
      %s32 = sshll.u32 %s1, 4
      %s33 = int_to_ptr.hbm [resolvable:$true] %s32
      %s34 = sshll.u32 [#allocation5], 4
      %s35 = int_to_ptr.vmem [resolvable:$true] %s34
      %37 = dma.hbm_to_vmem [thread:$0]  %s33, 128, %s35, [#allocation6]
    $region9: #{tpu_custom_call.1} parent=1 // pred_fallthru
      _
    // Predicated region
    $region10: #{tpu_custom_call.1} parent=1 // pred_check
      _
    $region11: #{tpu_custom_call.1} parent=1 // pred_check_branch
      %39 = sbr.rel (0) target = $region13
    $region12: #{tpu_custom_call.1} parent=1 // pred_region
      %41 = vsyncadd [#allocation6], 0
      %s42 = sshll.u32 %s2, 4
      %s43 = int_to_ptr.hbm [resolvable:$true] %s42
      %s44 = sshll.u32 [#allocation7], 4
      %s45 = int_to_ptr.vmem [resolvable:$true] %s44
      %50 = dma.hbm_to_vmem [thread:$0]  %s43, 384, %s45, [#allocation6], 128, 128, 8
    $region13: #{tpu_custom_call.1} parent=1 // pred_fallthru
      _
    // Predicated region
    $region14: #{tpu_custom_call.1} parent=1 // pred_check
      _
    $region15: #{tpu_custom_call.1} parent=1 // pred_check_branch
      %52 = sbr.rel (0) target = $region17
    $region16: #{tpu_custom_call.1} parent=1 // pred_region
      %54 = vsyncadd [#allocation9], 0
      %s56 = sshll.u32 %s3, 4
      %s57 = int_to_ptr.hbm [resolvable:$true] %s56
      %s58 = sshll.u32 [#allocation8], 4
      %s59 = int_to_ptr.vmem [resolvable:$true] %s58
      %61 = dma.hbm_to_vmem [thread:$0]  %s57, 128, %s59, [#allocation9]
    $region17: #{tpu_custom_call.1} parent=1 // pred_fallthru
      _
    // Predicated region
    $region18: #{tpu_custom_call.1} parent=1 // pred_check
      _
    $region19: #{tpu_custom_call.1} parent=1 // pred_check_branch
      %63 = sbr.rel (0) target = $region21
    $region20: #{tpu_custom_call.1} parent=1 // pred_region
      _
    $region21: #{tpu_custom_call.1} parent=1 // pred_fallthru
      _
    // Predicated region
    $region22: #{tpu_custom_call.1} parent=1 // pred_check
      _
    $region23: #{tpu_custom_call.1} parent=1 // pred_check_branch
      %65 = sbr.rel (0) target = $region25
    $region24: #{tpu_custom_call.1} parent=1 // pred_region
      _
    $region25: #{tpu_custom_call.1} parent=1 // pred_fallthru
      _
    // Predicated region
    $region26: #{tpu_custom_call.1} parent=1 // pred_check
      _
    $region27: #{tpu_custom_call.1} parent=1 // pred_check_branch
      %67 = sbr.rel (0) target = $region29
    $region28: #{tpu_custom_call.1} parent=1 // pred_region
      _
    $region29: #{tpu_custom_call.1} parent=1 // pred_fallthru
      _
    // Predicated region
    $region30: #{tpu_custom_call.1} parent=1 // pred_check
      _
    $region31: #{tpu_custom_call.1} parent=1 // pred_check_branch
      %69 = sbr.rel (0) target = $region33
    $region32: #{tpu_custom_call.1} parent=1 // pred_region
      %71 = dma.done [#allocation4], 128
    $region33: #{tpu_custom_call.1} parent=1 // pred_fallthru
      _
    // Predicated region
    $region34: #{tpu_custom_call.1} parent=1 // pred_check
      _
    $region35: #{tpu_custom_call.1} parent=1 // pred_check_branch
      %73 = sbr.rel (0) target = $region37
    $region36: #{tpu_custom_call.1} parent=1 // pred_region
      %75 = dma.done [#allocation6], 128
    $region37: #{tpu_custom_call.1} parent=1 // pred_fallthru
      _
    // Predicated region
    $region38: #{tpu_custom_call.1} parent=1 // pred_check
      _
    $region39: #{tpu_custom_call.1} parent=1 // pred_check_branch
      %77 = sbr.rel (0) target = $region41
    $region40: #{tpu_custom_call.1} parent=1 // pred_region
      %79 = dma.done [#allocation6], 384
    $region41: #{tpu_custom_call.1} parent=1 // pred_fallthru
      _
    // Predicated region
    $region42: #{tpu_custom_call.1} parent=1 // pred_check
      _
    $region43: #{tpu_custom_call.1} parent=1 // pred_check_branch
      %81 = sbr.rel (0) target = $region45
    $region44: #{tpu_custom_call.1} parent=1 // pred_region
      %83 = dma.done [#allocation9], 128
    $region45: #{tpu_custom_call.1} parent=1 // pred_fallthru
      _
    %v84 = vld [vmem:[#allocation3] sm:$0xff]
    %v85 = vld [vmem:[#allocation7] sm:$0xff]
    %v86 = vld [vmem:[#allocation7 + $0x8] sm:$0xff]
    %v87 = vld [vmem:[#allocation7 + $0x10] sm:$0xff]
    %v88 = vld [vmem:[#allocation5] sm:$0xff]
    %v89 = vld [vmem:[#allocation8] sm:$0xff]
    %vm90 = vcmask 64512
    %v92 = vsel %vm90, %v88, 0
    %94 = vmatpush.msra.mxu0 0.0
    %95 = vmatpush.msra.mxu0 0.0
    %96 = vmatpush.msra.mxu0 0.0
    %97 = vmatpush.msra.mxu0 0.0
    %98 = vmatpush.msra.mxu0 0.0
    %99 = vmatpush.msra.mxu0 0.0
    %100 = vmatpush.msra.mxu0 0.0
    %101 = vmatpush.msra.mxu0 0.0
    %102 = vmatpush.msra.mxu0 0.0
    %103 = vmatpush.msra.mxu0 0.0
    %104 = vmatpush.msra.mxu0 0.0
    %105 = vmatpush.msra.mxu0 0.0
    %106 = vmatpush.msra.mxu0 0.0
    %107 = vmatpush.msra.mxu0 0.0
    %108 = vmatpush.msra.mxu0 0.0
    %109 = vmatpush.msra.mxu0 %v89
    %110 = vmatmul.f32.gmra.mxu0 %v92
    %v111 = vpop.f32.mrf.mxu0
    %v112 = vadd.f32 0.0, %v111
    %113 = vdwg.mxu0
    %vm114 = vcmask 195584
    %v116 = vsel %vm114, %v84, 0
    %118 = vmatpush.msra.mxu0 0.0
    %119 = vmatpush.msra.mxu0 0.0
    %120 = vmatpush.msra.mxu0 0.0
    %121 = vmatpush.msra.mxu0 0.0
    %122 = vmatpush.msra.mxu0 0.0
    %123 = vmatpush.msra.mxu0 0.0
    %124 = vmatpush.msra.mxu0 0.0
    %125 = vmatpush.msra.mxu0 0.0
    %126 = vmatpush.msra.mxu0 0.0
    %127 = vmatpush.msra.mxu0 0.0
    %128 = vmatpush.msra.mxu0 0.0
    %129 = vmatpush.msra.mxu0 0.0
    %130 = vmatpush.msra.mxu0 0.0
    %131 = vmatpush.msra.mxu0 %v87
    %132 = vmatpush.msra.mxu0 %v86
    %133 = vmatpush.msra.mxu0 %v85
    %134 = vmatmul.f32.gmra.mxu0 %v116
    %v135 = vpop.f32.mrf.mxu0
    %v136 = vadd.f32 %v112, %v135
    %137 = vdwg.mxu0
    %v138 = vld [vmem:[%s4] sm:$0x1]
    %v140 = vperm.slane %v138, 0
    %v142 = vadd.f32 %v136, %v140
    %v143 = vtanh.pop %v142
    %v144 = vld [vmem:[%s5] sm:$0x1]
    %v146 = vperm.slane %v144, 0
    %v148 = vmul.f32 %v143, %v146
    %149 = vadd.xlane.f32.xlu0 %v148
    %v150 = vpop.xlane.xlu0 %149
    %s151 = sld [smem:[#allocation2]]
    %v152 = vstv %s151
    %v153 = vadd.f32 %v150, %v152
    %vm154 = vcmask 7168
    %155 = vst.msk [vmem:[%s7] sm:$0xff] %vm154, %v153
    // Predicated region
    $region46: #{tpu_custom_call.1} parent=1 // pred_check
      _
    $region47: #{tpu_custom_call.1} parent=1 // pred_check_branch
      %157 = sbr.rel (0) target = $region49
    $region48: #{tpu_custom_call.1} parent=1 // pred_region
      _
    $region49: #{tpu_custom_call.1} parent=1 // pred_fallthru
      _
    // Predicated region
    $region50: #{tpu_custom_call.1} parent=1 // pred_check
      _
    $region51: #{tpu_custom_call.1} parent=1 // pred_check_branch
      %159 = sbr.rel (0) target = $region53
    $region52: #{tpu_custom_call.1} parent=1 // pred_region
      _
    $region53: #{tpu_custom_call.1} parent=1 // pred_fallthru
      _
    %160 = vsyncpa [#allocation4], 1
    %161 = vsyncpa [#allocation6], 1
    %162 = vsyncpa [#allocation9], 1

</llo_original>
